<compile_context>
chip_gen: v7x
topology: tpu7x:2x2x1
jax: 0.10.0
libtpu: 0.0.40
codegen_flags: <defaults>
</compile_context>

<pallas_src>
import functools

import jax
import jax.numpy as jnp
from jax import lax
from jax.experimental import pallas as pl
from jax.experimental.pallas import tpu as pltpu

HIDDEN = 24     # nn.RNN(p, 24) hidden size
HP = 128        # lane width of the packed hidden state
GROUPS = 5      # batch rows packed per 128-lane row (5 * 24 = 120 <= 128)


def _round_up(a, m):
    return ((a + m - 1) // m) * m


def _make_kernel(T_TILE, B_TILE, n_t, tail):
    """tail = number of valid timesteps in the last time tile (static)."""

    def kernel(x_ref, wih_ref, whh_ref, b_ref, wlin_ref, blin_ref,
               out_ref, h_scratch, pre_scratch):
        # x_ref      : (T_TILE, B_TILE, G*p) bf16 time-major packed input tile
        # wih_ref    : (G*p, HP) bf16  block-diagonal pad(W_ih^T)
        # whh_ref    : (HP, HP)  bf16  block-diagonal pad(W_hh^T)
        # b_ref      : (1, HP)   f32   tiled pad(b_ih + b_hh)
        # wlin_ref   : (HP, HP)  bf16  block-diagonal pad(W_lin^T)
        # blin_ref   : (1, HP)   f32   tiled pad(b_lin)
        # out_ref    : (B_TILE, HP) f32
        # h_scratch  : (B_TILE, HP) f32          hidden state, resident across t tiles
        # pre_scratch: (T_TILE*B_TILE, HP) f32   hoisted input projection
        t_idx = pl.program_id(1)

        @pl.when(t_idx == 0)
        def _():
            h_scratch[...] = jnp.zeros_like(h_scratch)

        # ---- hoisted input projection: ONE bf16 matmul per time tile -------
        gk = x_ref.shape[-1]
        x_flat = x_ref[...].reshape(T_TILE * B_TILE, gk)
        pre_scratch[...] = (
            jnp.dot(x_flat, wih_ref[...], preferred_element_type=jnp.float32)
            + b_ref[...])                                   # bias folded once

        whh = whh_ref[...]                                  # bf16, loaded once

        def recurrence(steps):
            def body(t, h):
                off = pl.multiple_of(t * B_TILE, B_TILE)
                pre_t = pre_scratch[pl.ds(off, B_TILE), :]
                z = pre_t + jnp.dot(h.astype(jnp.bfloat16), whh,
                                    preferred_element_type=jnp.float32)
                return jnp.tanh(z)
            h = lax.fori_loop(0, steps, body, h_scratch[...],
                              unroll=min(8, steps))
            h_scratch[...] = h                              # one store / tile

        if tail == T_TILE:
            recurrence(T_TILE)                  # no tail -> no masking anywhere
        else:
            # Padded tail: run a statically-shorter loop in the last tile only;
            # the hot path has no per-timestep select.
            @pl.when(t_idx < n_t - 1)
            def _():
                recurrence(T_TILE)

            @pl.when(t_idx == n_t - 1)
            def _():
                recurrence(tail)

        # ---- epilogue: tanh on final hidden + linear ------------------------
        @pl.when(t_idx == n_t - 1)
        def _():
            h_last = jnp.tanh(h_scratch[...])   # F.tanh(rnn_out)[:, -1, :]
            out_ref[...] = (
                jnp.dot(h_last.astype(jnp.bfloat16), wlin_ref[...],
                        preferred_element_type=jnp.float32)
                + blin_ref[...])

    return kernel


@functools.partial(jax.jit, static_argnames=("t_tile", "b_tile"))
def rnn_model_forward(x, params, *, t_tile=64, b_tile=128):
    """x: (B, T, p) float32. Returns (B, 24, 1), matching the PyTorch module."""
    B, T, p = x.shape
    H, G = HIDDEN, GROUPS
    GH = G * H                    # 120 used lanes
    GK = G * p                    # packed input-feature width

    # ---- batch packing / tiling (5 batch rows per packed row) --------------
    rows = -(-B // G)
    rows8 = _round_up(max(rows, 1), 8)
    if rows8 <= 8:
        B_TILE = 8
    else:
        # >= 2 batch tiles so the "parallel" axis shards across v7x's two TCs;
        # capped at b_tile rows to bound h vreg/VMEM pressure.
        B_TILE = min(_round_up(b_tile, 8), _round_up(-(-rows8 // 2), 8))
    n_b = -(-rows8 // B_TILE)
    B_ROWS = n_b * B_TILE
    B_total = B_ROWS * G

    # ---- time tiling ---------------------------------------------------------
    T_TILE = max(1, min(t_tile, T))
    n_t = -(-T // T_TILE)
    T_pad = n_t * T_TILE
    tail = T - (n_t - 1) * T_TILE

    # ---- pack x: (B, T, p) -> time-major (T_pad, B_ROWS, G*p), bf16 ----------
    # TODO(synk): accepting time-major (or pre-packed) x from the caller would
    # remove this layout pass entirely; the PyTorch spec is batch_first.
    xw = x.astype(jnp.bfloat16)
    if (B_total != B) or (T_pad != T):
        xw = jnp.pad(xw, ((0, B_total - B), (0, T_pad - T), (0, 0)))
    x_packed = jnp.transpose(xw, (1, 0, 2)).reshape(T_pad, B_ROWS, GK)

    # ---- block-diagonal packed weights (zeros elsewhere keep pad lanes 0) ----
    f32 = jnp.float32
    wih = jnp.zeros((GK, HP), f32)
    whh = jnp.zeros((HP, HP), f32)
    wlin = jnp.zeros((HP, HP), f32)
    for g in range(G):
        wih = wih.at[g * p:(g + 1) * p, g * H:(g + 1) * H].set(params["w_ih"].T)
        whh = whh.at[g * H:(g + 1) * H, g * H:(g + 1) * H].set(params["w_hh"].T)
        wlin = wlin.at[g * H:(g + 1) * H, g * H:(g + 1) * H].set(params["w_lin"].T)
    b_rnn = jnp.zeros((1, HP), f32).at[0, :GH].set(
        jnp.tile(params["b_ih"] + params["b_hh"], G))
    b_lin = jnp.zeros((1, HP), f32).at[0, :GH].set(jnp.tile(params["b_lin"], G))
    wih = wih.astype(jnp.bfloat16)
    whh = whh.astype(jnp.bfloat16)
    wlin = wlin.astype(jnp.bfloat16)

    # ---- explicit VMEM budget (v7x scoped default 32 MiB, v5e 16 MiB) --------
    gk_lanes = _round_up(GK, 128)
    est = (2 * T_TILE * B_TILE * gk_lanes * 2          # x tile, double-buffered bf16
           + T_TILE * B_TILE * HP * 4                  # pre scratch (f32)
           + 3 * B_TILE * HP * 4                       # h scratch + out buffers
           + 2 * (gk_lanes * HP + 2 * HP * HP) * 2     # weight buffers (bf16)
           + 4 * 8 * HP * 4)                           # bias buffers
    vmem_limit = int(min(max(est + (8 << 20), 24 << 20), 56 << 20))

    kernel = _make_kernel(T_TILE, B_TILE, n_t, tail)

    out = pl.pallas_call(
        kernel,
        out_shape=jax.ShapeDtypeStruct((B_ROWS, HP), jnp.float32),
        grid_spec=pltpu.PrefetchScalarGridSpec(
            num_scalar_prefetch=0,
            grid=(n_b, n_t),                     # batch (parallel), time (seq)
            in_specs=[
                pl.BlockSpec((T_TILE, B_TILE, GK), lambda b, t: (t, b, 0)),
                pl.BlockSpec((GK, HP), lambda b, t: (0, 0)),
                pl.BlockSpec((HP, HP), lambda b, t: (0, 0)),
                pl.BlockSpec((1, HP), lambda b, t: (0, 0)),
                pl.BlockSpec((HP, HP), lambda b, t: (0, 0)),
                pl.BlockSpec((1, HP), lambda b, t: (0, 0)),
            ],
            out_specs=pl.BlockSpec((B_TILE, HP), lambda b, t: (b, 0)),
            scratch_shapes=[
                pltpu.VMEM((B_TILE, HP), jnp.float32),
                pltpu.VMEM((T_TILE * B_TILE, HP), jnp.float32),
            ],
        ),
        compiler_params=pltpu.CompilerParams(
            dimension_semantics=("parallel", "arbitrary"),
            vmem_limit_bytes=vmem_limit),
    )(x_packed, wih, whh, b_rnn, wlin, b_lin)

    # ---- unpack: lanes [g*24, (g+1)*24) of packed row r -> batch r*G + g ------
    out = out[:, :GH].reshape(B_ROWS * G, H)[:B]
    return out.reshape(B, H, 1)                  # x.view(len(x), -1, 1)


def init_params(key, p):
    """Deterministic synthetic params, same shapes as the PyTorch module."""
    H = HIDDEN
    k = 1.0 / jnp.sqrt(jnp.float32(H))
    keys = jax.random.split(key, 6)
    return {
        "w_ih":  jax.random.uniform(keys[0], (H, p), jnp.float32, -k, k),
        "w_hh":  jax.random.uniform(keys[1], (H, H), jnp.float32, -k, k),
        "b_ih":  jax.random.uniform(keys[2], (H,),   jnp.float32, -k, k),
        "b_hh":  jax.random.uniform(keys[3], (H,),   jnp.float32, -k, k),
        "w_lin": jax.random.uniform(keys[4], (H, H), jnp.float32, -k, k),
        "b_lin": jax.random.uniform(keys[5], (H,),   jnp.float32, -k, k),
    }


def reference_forward(x, params):
    """Pure-JAX f32 reference of the PyTorch forward."""
    B, T, p = x.shape
    H = HIDDEN
    h = jnp.zeros((B, H), jnp.float32)
    for t in range(T):
        h = jnp.tanh(x[:, t, :] @ params["w_ih"].T + params["b_ih"]
                     + h @ params["w_hh"].T + params["b_hh"])
    h = jnp.tanh(h)
    out = h @ params["w_lin"].T + params["b_lin"]
    return out.reshape(B, H, 1)


if __name__ == "__main__":
    key = jax.random.PRNGKey(0)
    k1, k2, k3, k4 = jax.random.split(key, 4)

    # Case 1: small shapes implied by the module (B=2, T=8, p=4).
    B, T, p = 2, 8, 4
    x = jax.random.normal(k1, (B, T, p), jnp.float32)
    params = init_params(k2, p)
    out = jax.block_until_ready(rnn_model_forward(x, params))
    ref = reference_forward(x, params)
    assert out.shape == (B, HIDDEN, 1)
    # bf16 MXU operands with f32 accumulation -> relaxed tolerance vs f32 ref.
    assert jnp.allclose(out, ref, atol=5e-2, rtol=5e-2), float(
        jnp.max(jnp.abs(out - ref)))

    # Case 2: exercises multiple batch tiles, multiple time tiles and the
    # padded-tail path (B=43 -> 2 batch tiles; T=13, t_tile=5 -> tail of 3).
    B2, T2, p2 = 43, 13, 3
    x2 = jax.random.normal(k3, (B2, T2, p2), jnp.float32)
    params2 = init_params(k4, p2)
    out2 = jax.block_until_ready(rnn_model_forward(x2, params2, t_tile=5))
    ref2 = reference_forward(x2, params2)
    assert out2.shape == (B2, HIDDEN, 1)
    assert jnp.allclose(out2, ref2, atol=5e-2, rtol=5e-2), float(
        jnp.max(jnp.abs(out2 - ref2)))

    print("KERNEL_OK")
</pallas_src>

<mosaic_0001>
module attributes {stable_mosaic.version = 11 : i64} {
  func.func @kernel(%arg0: i32, %arg1: i32, %arg2: memref<8x8x20xbf16, #tpu.memory_space<vmem>>, %arg3: memref<20x128xbf16, #tpu.memory_space<vmem>>, %arg4: memref<128x128xbf16, #tpu.memory_space<vmem>>, %arg5: memref<1x128xf32, #tpu.memory_space<vmem>>, %arg6: memref<128x128xbf16, #tpu.memory_space<vmem>>, %arg7: memref<1x128xf32, #tpu.memory_space<vmem>>, %arg8: memref<8x128xf32, #tpu.memory_space<vmem>>, %arg9: memref<8x128xf32, #tpu.memory_space<vmem>>, %arg10: memref<64x128xf32, #tpu.memory_space<vmem>>) attributes {dimension_semantics = [#tpu.dimension_semantics<parallel>, #tpu.dimension_semantics<arbitrary>], iteration_bounds = array<i64: 1, 1>, scalar_prefetch = 0 : i64, scratch_operands = 2 : i64, tpu.core_type = #tpu.core_type<tc>, window_params = [{transform_indices = @transform_0, window_bounds = array<i64: 8, 8, 20>}, {pipeline_mode = #tpu.pipeline_mode<synchronous>, transform_indices = @transform_1, window_bounds = array<i64: 20, 128>}, {pipeline_mode = #tpu.pipeline_mode<synchronous>, transform_indices = @transform_2, window_bounds = array<i64: 128, 128>}, {pipeline_mode = #tpu.pipeline_mode<synchronous>, transform_indices = @transform_3, window_bounds = array<i64: 1, 128>}, {pipeline_mode = #tpu.pipeline_mode<synchronous>, transform_indices = @transform_4, window_bounds = array<i64: 128, 128>}, {pipeline_mode = #tpu.pipeline_mode<synchronous>, transform_indices = @transform_5, window_bounds = array<i64: 1, 128>}, {transform_indices = @transform_6, window_bounds = array<i64: 8, 128>}]} {
    %c0_i32 = arith.constant 0 : i32
    %0 = arith.cmpi eq, %arg1, %c0_i32 : i32
    %1 = arith.extui %0 : i1 to i32
    %c0_i32_0 = arith.constant 0 : i32
    %2 = arith.cmpi ne, %1, %c0_i32_0 : i32
    scf.if %2 {
      %cst_42 = arith.constant 0.000000e+00 : f32
      %81 = vector.broadcast %cst_42 : f32 to vector<8x128xf32>
      %c0_43 = arith.constant 0 : index
      %c0_44 = arith.constant 0 : index
      %82 = vector.load %arg9[%c0_43, %c0_44] : memref<8x128xf32, #tpu.memory_space<vmem>>, vector<8x128xf32>
      tpu.vector_store %arg9[%c0_43, %c0_44], %81 {strides = array<i32>} : memref<8x128xf32, #tpu.memory_space<vmem>>, vector<8x128xf32>,
    } else {
    }
    %c0 = arith.constant 0 : index
    %c0_1 = arith.constant 0 : index
    %c0_2 = arith.constant 0 : index
    %3 = vector.load %arg2[%c0, %c0_1, %c0_2] : memref<8x8x20xbf16, #tpu.memory_space<vmem>>, vector<8x8x20xbf16>
    %4 = vector.shape_cast %3 : vector<8x8x20xbf16> to vector<64x20xbf16>
    %c0_3 = arith.constant 0 : index
    %c0_4 = arith.constant 0 : index
    %5 = vector.load %arg3[%c0_3, %c0_4] : memref<20x128xbf16, #tpu.memory_space<vmem>>, vector<20x128xbf16>
    %cst = arith.constant dense<0.000000e+00> : vector<64x128xf32>
    %6 = tpu.matmul %4, %5, %cst {dimension_numbers = #tpu.dot_dimension_numbers<[1], [0], [0], [1], [0, 0, 1, 1], [], []>} : vector<64x20xbf16>, vector<20x128xbf16>, vector<64x128xf32> -> vector<64x128xf32>
    %c0_5 = arith.constant 0 : index
    %c0_6 = arith.constant 0 : index
    %7 = vector.load %arg5[%c0_5, %c0_6] : memref<1x128xf32, #tpu.memory_space<vmem>>, vector<1x128xf32>
    %8 = vector.broadcast %7 : vector<1x128xf32> to vector<64x128xf32>
    %9 = arith.addf %6, %8 : vector<64x128xf32>
    %c0_7 = arith.constant 0 : index
    %c0_8 = arith.constant 0 : index
    %10 = vector.load %arg10[%c0_7, %c0_8] : memref<64x128xf32, #tpu.memory_space<vmem>>, vector<64x128xf32>
    tpu.vector_store %arg10[%c0_7, %c0_8], %9 {strides = array<i32>} : memref<64x128xf32, #tpu.memory_space<vmem>>, vector<64x128xf32>,
    %c0_9 = arith.constant 0 : index
    %c0_10 = arith.constant 0 : index
    %11 = vector.load %arg4[%c0_9, %c0_10] : memref<128x128xbf16, #tpu.memory_space<vmem>>, vector<128x128xbf16>
    %c0_11 = arith.constant 0 : index
    %c0_12 = arith.constant 0 : index
    %12 = vector.load %arg9[%c0_11, %c0_12] : memref<8x128xf32, #tpu.memory_space<vmem>>, vector<8x128xf32>
    %c0_i32_13 = arith.constant 0 : i32
    %c8_i32 = arith.constant 8 : i32
    %13 = arith.muli %c0_i32_13, %c8_i32 : i32
    %14 = tpu.assume_multiple %13, 8 : i32
    %15 = arith.index_cast %14 : i32 to index
    %c0_14 = arith.constant 0 : index
    %16 = vector.load %arg10[%15, %c0_14] : memref<64x128xf32, #tpu.memory_space<vmem>>, vector<8x128xf32>
    %17 = arith.truncf %12 : vector<8x128xf32> to vector<8x128xbf16>
    %cst_15 = arith.constant dense<0.000000e+00> : vector<8x128xf32>
    %18 = tpu.matmul %17, %11, %cst_15 {dimension_numbers = #tpu.dot_dimension_numbers<[1], [0], [0], [1], [0, 0, 1, 1], [], []>} : vector<8x128xbf16>, vector<128x128xbf16>, vector<8x128xf32> -> vector<8x128xf32>
    %19 = arith.addf %16, %18 : vector<8x128xf32>
    %20 = math.tanh %19 : vector<8x128xf32>
    %c1_i32 = arith.constant 1 : i32
    %c8_i32_16 = arith.constant 8 : i32
    %21 = arith.muli %c1_i32, %c8_i32_16 : i32
    %22 = tpu.assume_multiple %21, 8 : i32
    %23 = arith.index_cast %22 : i32 to index
    %c0_17 = arith.constant 0 : index
    %24 = vector.load %arg10[%23, %c0_17] : memref<64x128xf32, #tpu.memory_space<vmem>>, vector<8x128xf32>
    %25 = arith.truncf %20 : vector<8x128xf32> to vector<8x128xbf16>
    %cst_18 = arith.constant dense<0.000000e+00> : vector<8x128xf32>
    %26 = tpu.matmul %25, %11, %cst_18 {dimension_numbers = #tpu.dot_dimension_numbers<[1], [0], [0], [1], [0, 0, 1, 1], [], []>} : vector<8x128xbf16>, vector<128x128xbf16>, vector<8x128xf32> -> vector<8x128xf32>
    %27 = arith.addf %24, %26 : vector<8x128xf32>
    %28 = math.tanh %27 : vector<8x128xf32>
    %c2_i32 = arith.constant 2 : i32
    %c8_i32_19 = arith.constant 8 : i32
    %29 = arith.muli %c2_i32, %c8_i32_19 : i32
    %30 = tpu.assume_multiple %29, 8 : i32
    %31 = arith.index_cast %30 : i32 to index
    %c0_20 = arith.constant 0 : index
    %32 = vector.load %arg10[%31, %c0_20] : memref<64x128xf32, #tpu.memory_space<vmem>>, vector<8x128xf32>
    %33 = arith.truncf %28 : vector<8x128xf32> to vector<8x128xbf16>
    %cst_21 = arith.constant dense<0.000000e+00> : vector<8x128xf32>
    %34 = tpu.matmul %33, %11, %cst_21 {dimension_numbers = #tpu.dot_dimension_numbers<[1], [0], [0], [1], [0, 0, 1, 1], [], []>} : vector<8x128xbf16>, vector<128x128xbf16>, vector<8x128xf32> -> vector<8x128xf32>
    %35 = arith.addf %32, %34 : vector<8x128xf32>
    %36 = math.tanh %35 : vector<8x128xf32>
    %c3_i32 = arith.constant 3 : i32
    %c8_i32_22 = arith.constant 8 : i32
    %37 = arith.muli %c3_i32, %c8_i32_22 : i32
    %38 = tpu.assume_multiple %37, 8 : i32
    %39 = arith.index_cast %38 : i32 to index
    %c0_23 = arith.constant 0 : index
    %40 = vector.load %arg10[%39, %c0_23] : memref<64x128xf32, #tpu.memory_space<vmem>>, vector<8x128xf32>
    %41 = arith.truncf %36 : vector<8x128xf32> to vector<8x128xbf16>
    %cst_24 = arith.constant dense<0.000000e+00> : vector<8x128xf32>
    %42 = tpu.matmul %41, %11, %cst_24 {dimension_numbers = #tpu.dot_dimension_numbers<[1], [0], [0], [1], [0, 0, 1, 1], [], []>} : vector<8x128xbf16>, vector<128x128xbf16>, vector<8x128xf32> -> vector<8x128xf32>
    %43 = arith.addf %40, %42 : vector<8x128xf32>
    %44 = math.tanh %43 : vector<8x128xf32>
    %c4_i32 = arith.constant 4 : i32
    %c8_i32_25 = arith.constant 8 : i32
    %45 = arith.muli %c4_i32, %c8_i32_25 : i32
    %46 = tpu.assume_multiple %45, 8 : i32
    %47 = arith.index_cast %46 : i32 to index
    %c0_26 = arith.constant 0 : index
    %48 = vector.load %arg10[%47, %c0_26] : memref<64x128xf32, #tpu.memory_space<vmem>>, vector<8x128xf32>
    %49 = arith.truncf %44 : vector<8x128xf32> to vector<8x128xbf16>
    %cst_27 = arith.constant dense<0.000000e+00> : vector<8x128xf32>
    %50 = tpu.matmul %49, %11, %cst_27 {dimension_numbers = #tpu.dot_dimension_numbers<[1], [0], [0], [1], [0, 0, 1, 1], [], []>} : vector<8x128xbf16>, vector<128x128xbf16>, vector<8x128xf32> -> vector<8x128xf32>
    %51 = arith.addf %48, %50 : vector<8x128xf32>
    %52 = math.tanh %51 : vector<8x128xf32>
    %c5_i32 = arith.constant 5 : i32
    %c8_i32_28 = arith.constant 8 : i32
    %53 = arith.muli %c5_i32, %c8_i32_28 : i32
    %54 = tpu.assume_multiple %53, 8 : i32
    %55 = arith.index_cast %54 : i32 to index
    %c0_29 = arith.constant 0 : index
    %56 = vector.load %arg10[%55, %c0_29] : memref<64x128xf32, #tpu.memory_space<vmem>>, vector<8x128xf32>
    %57 = arith.truncf %52 : vector<8x128xf32> to vector<8x128xbf16>
    %cst_30 = arith.constant dense<0.000000e+00> : vector<8x128xf32>
    %58 = tpu.matmul %57, %11, %cst_30 {dimension_numbers = #tpu.dot_dimension_numbers<[1], [0], [0], [1], [0, 0, 1, 1], [], []>} : vector<8x128xbf16>, vector<128x128xbf16>, vector<8x128xf32> -> vector<8x128xf32>
    %59 = arith.addf %56, %58 : vector<8x128xf32>
    %60 = math.tanh %59 : vector<8x128xf32>
    %c6_i32 = arith.constant 6 : i32
    %c8_i32_31 = arith.constant 8 : i32
    %61 = arith.muli %c6_i32, %c8_i32_31 : i32
    %62 = tpu.assume_multiple %61, 8 : i32
    %63 = arith.index_cast %62 : i32 to index
    %c0_32 = arith.constant 0 : index
    %64 = vector.load %arg10[%63, %c0_32] : memref<64x128xf32, #tpu.memory_space<vmem>>, vector<8x128xf32>
    %65 = arith.truncf %60 : vector<8x128xf32> to vector<8x128xbf16>
    %cst_33 = arith.constant dense<0.000000e+00> : vector<8x128xf32>
    %66 = tpu.matmul %65, %11, %cst_33 {dimension_numbers = #tpu.dot_dimension_numbers<[1], [0], [0], [1], [0, 0, 1, 1], [], []>} : vector<8x128xbf16>, vector<128x128xbf16>, vector<8x128xf32> -> vector<8x128xf32>
    %67 = arith.addf %64, %66 : vector<8x128xf32>
    %68 = math.tanh %67 : vector<8x128xf32>
    %c7_i32 = arith.constant 7 : i32
    %c8_i32_34 = arith.constant 8 : i32
    %69 = arith.muli %c7_i32, %c8_i32_34 : i32
    %70 = tpu.assume_multiple %69, 8 : i32
    %71 = arith.index_cast %70 : i32 to index
    %c0_35 = arith.constant 0 : index
    %72 = vector.load %arg10[%71, %c0_35] : memref<64x128xf32, #tpu.memory_space<vmem>>, vector<8x128xf32>
    %73 = arith.truncf %68 : vector<8x128xf32> to vector<8x128xbf16>
    %cst_36 = arith.constant dense<0.000000e+00> : vector<8x128xf32>
    %74 = tpu.matmul %73, %11, %cst_36 {dimension_numbers = #tpu.dot_dimension_numbers<[1], [0], [0], [1], [0, 0, 1, 1], [], []>} : vector<8x128xbf16>, vector<128x128xbf16>, vector<8x128xf32> -> vector<8x128xf32>
    %75 = arith.addf %72, %74 : vector<8x128xf32>
    %76 = math.tanh %75 : vector<8x128xf32>
    %c8_i32_37 = arith.constant 8 : i32
    %c0_38 = arith.constant 0 : index
    %c0_39 = arith.constant 0 : index
    %77 = vector.load %arg9[%c0_38, %c0_39] : memref<8x128xf32, #tpu.memory_space<vmem>>, vector<8x128xf32>
    tpu.vector_store %arg9[%c0_38, %c0_39], %76 {strides = array<i32>} : memref<8x128xf32, #tpu.memory_space<vmem>>, vector<8x128xf32>,
    %c0_i32_40 = arith.constant 0 : i32
    %78 = arith.cmpi eq, %arg1, %c0_i32_40 : i32
    %79 = arith.extui %78 : i1 to i32
    %c0_i32_41 = arith.constant 0 : i32
    %80 = arith.cmpi ne, %79, %c0_i32_41 : i32
    scf.if %80 {
      %c0_42 = arith.constant 0 : index
      %c0_43 = arith.constant 0 : index
      %81 = vector.load %arg9[%c0_42, %c0_43] : memref<8x128xf32, #tpu.memory_space<vmem>>, vector<8x128xf32>
      %82 = math.tanh %81 : vector<8x128xf32>
      %83 = arith.truncf %82 : vector<8x128xf32> to vector<8x128xbf16>
      %c0_44 = arith.constant 0 : index
      %c0_45 = arith.constant 0 : index
      %84 = vector.load %arg6[%c0_44, %c0_45] : memref<128x128xbf16, #tpu.memory_space<vmem>>, vector<128x128xbf16>
      %cst_46 = arith.constant dense<0.000000e+00> : vector<8x128xf32>
      %85 = tpu.matmul %83, %84, %cst_46 {dimension_numbers = #tpu.dot_dimension_numbers<[1], [0], [0], [1], [0, 0, 1, 1], [], []>} : vector<8x128xbf16>, vector<128x128xbf16>, vector<8x128xf32> -> vector<8x128xf32>
      %c0_47 = arith.constant 0 : index
      %c0_48 = arith.constant 0 : index
      %86 = vector.load %arg7[%c0_47, %c0_48] : memref<1x128xf32, #tpu.memory_space<vmem>>, vector<1x128xf32>
      %87 = vector.broadcast %86 : vector<1x128xf32> to vector<8x128xf32>
      %88 = arith.addf %85, %87 : vector<8x128xf32>
      %c0_49 = arith.constant 0 : index
      %c0_50 = arith.constant 0 : index
      %89 = vector.load %arg8[%c0_49, %c0_50] : memref<8x128xf32, #tpu.memory_space<vmem>>, vector<8x128xf32>
      tpu.vector_store %arg8[%c0_49, %c0_50], %88 {strides = array<i32>} : memref<8x128xf32, #tpu.memory_space<vmem>>, vector<8x128xf32>,
    } else {
    }
    return
  }
  func.func @transform_0(%arg0: i32, %arg1: i32) -> (i32, i32, i32) {
    %c0_i32 = arith.constant 0 : i32
    %c0_i32_0 = arith.constant 0 : i32
    return %arg1, %arg0, %c0_i32 : i32, i32, i32
  }
  func.func @transform_1(%arg0: i32, %arg1: i32) -> (i32, i32) {
    %c0_i32 = arith.constant 0 : i32
    %c0_i32_0 = arith.constant 0 : i32
    %c0_i32_1 = arith.constant 0 : i32
    return %c0_i32, %c0_i32_0 : i32, i32
  }
  func.func @transform_2(%arg0: i32, %arg1: i32) -> (i32, i32) {
    %c0_i32 = arith.constant 0 : i32
    %c0_i32_0 = arith.constant 0 : i32
    %c0_i32_1 = arith.constant 0 : i32
    return %c0_i32, %c0_i32_0 : i32, i32
  }
  func.func @transform_3(%arg0: i32, %arg1: i32) -> (i32, i32) {
    %c0_i32 = arith.constant 0 : i32
    %c0_i32_0 = arith.constant 0 : i32
    %c0_i32_1 = arith.constant 0 : i32
    return %c0_i32, %c0_i32_0 : i32, i32
  }
  func.func @transform_4(%arg0: i32, %arg1: i32) -> (i32, i32) {
    %c0_i32 = arith.constant 0 : i32
    %c0_i32_0 = arith.constant 0 : i32
    %c0_i32_1 = arith.constant 0 : i32
    return %c0_i32, %c0_i32_0 : i32, i32
  }
  func.func @transform_5(%arg0: i32, %arg1: i32) -> (i32, i32) {
    %c0_i32 = arith.constant 0 : i32
    %c0_i32_0 = arith.constant 0 : i32
    %c0_i32_1 = arith.constant 0 : i32
    return %c0_i32, %c0_i32_0 : i32, i32
  }
  func.func @transform_6(%arg0: i32, %arg1: i32) -> (i32, i32) {
    %c0_i32 = arith.constant 0 : i32
    %c0_i32_0 = arith.constant 0 : i32
    return %arg0, %c0_i32 : i32, i32
  }
}

</mosaic_0001>

<llo_original>
// kernel: rnn_model_forward.1
$region0: #{rnn_model_forward.1}
  #allocation0 [shape = 'u32[]', space=smem, size = 0x4, offset = 0x4, fixed_abs, tag = 'smem constant byte address 0x4 - core index']
  #allocation1 [shape = 'u32[144,128]{1,0:T(1,128)}', space=vmem, size = 0x12000, scoped, tag = 'internal scratch']
  #allocation2 [shape = 'f32[8,128]{1,0:T(8,128)}', space=vmem, size = 0x1000, scoped, tag = 'scratch operand']
  #allocation3 [shape = 'f32[64,128]{1,0:T(8,128)}', space=vmem, size = 0x8000, scoped, tag = 'scratch operand']
  %s0 = inlined_call_operand.vmem [shape: bf16[8,8,20], index: 0, kind: input, shape index: {}]
  %s1 = inlined_call_operand.vmem [shape: bf16[20,128], index: 1, kind: input, shape index: {}]
  %s2 = inlined_call_operand.vmem [shape: bf16[128,128], index: 2, kind: input, shape index: {}]
  %s3 = inlined_call_operand.vmem [shape: f32[1,128], index: 3, kind: input, shape index: {}]
  %s4 = inlined_call_operand.vmem [shape: bf16[128,128], index: 4, kind: input, shape index: {}]
  %s5 = inlined_call_operand.vmem [shape: f32[1,128], index: 5, kind: input, shape index: {}]
  %s6 = inlined_call_operand.vmem [shape: f32[8,128], index: 6, kind: output, shape index: {}]
  %s7 = sld [smem:[#allocation0]]
  $region42: #{rnn_model_forward.1} parent=0
    _
  %s9 = ssub.s32 1, %s7
  %s10 = scalar_select 0, %s9, %s7
  // Predicated region
  $region2: #{rnn_model_forward.1} parent=0 // pred_check
    _
  $region3: #{rnn_model_forward.1} parent=0 // pred_check_branch
    %12 = sbr.rel (0) target = $region5
  $region4: #{rnn_model_forward.1} parent=0 // pred_region
    _
  $region5: #{rnn_model_forward.1} parent=0 // pred_fallthru
    _
  // Predicated region
  $region6: #{rnn_model_forward.1} parent=0 // pred_check
    _
  $region7: #{rnn_model_forward.1} parent=0 // pred_check_branch
    %14 = sbr.rel (0) target = $region9
  $region8: #{rnn_model_forward.1} parent=0 // pred_region
    _
  $region9: #{rnn_model_forward.1} parent=0 // pred_fallthru
    _
  // Predicated region
  $region10: #{rnn_model_forward.1} parent=0 // pred_check
    _
  $region11: #{rnn_model_forward.1} parent=0 // pred_check_branch
    %16 = sbr.rel (0) target = $region13
  $region12: #{rnn_model_forward.1} parent=0 // pred_region
    _
  $region13: #{rnn_model_forward.1} parent=0 // pred_fallthru
    _
  // Predicated region
  $region14: #{rnn_model_forward.1} parent=0 // pred_check
    _
  $region15: #{rnn_model_forward.1} parent=0 // pred_check_branch
    %18 = sbr.rel (0) target = $region17
  $region16: #{rnn_model_forward.1} parent=0 // pred_region
    _
  $region17: #{rnn_model_forward.1} parent=0 // pred_fallthru
    _
  // Predicated region
  $region18: #{rnn_model_forward.1} parent=0 // pred_check
    _
  $region19: #{rnn_model_forward.1} parent=0 // pred_check_branch
    %20 = sbr.rel (0) target = $region21
  $region20: #{rnn_model_forward.1} parent=0 // pred_region
    _
  $region21: #{rnn_model_forward.1} parent=0 // pred_fallthru
    _
  // Predicated region
  $region22: #{rnn_model_forward.1} parent=0 // pred_check
    _
  $region23: #{rnn_model_forward.1} parent=0 // pred_check_branch
    %22 = sbr.rel (0) target = $region25
  $region24: #{rnn_model_forward.1} parent=0 // pred_region
    _
  $region25: #{rnn_model_forward.1} parent=0 // pred_fallthru
    _
  %p24 = scmp.eq.s32.totalorder 0, 0
  // Predicated region
  $region26: #{rnn_model_forward.1} parent=0 // pred_check
    %p25 = pneg %p24
  $region27: #{rnn_model_forward.1} parent=0 // pred_check_branch
    %27 = sbr.rel (%p25) target = $region29
  $region28: #{rnn_model_forward.1} parent=0 // pred_region
    %28 = vst [vmem:[#allocation2] sm:$0xff] 0.0
  $region29: #{rnn_model_forward.1} parent=0 // pred_fallthru
    _
  %v29 = vld [vmem:[%s0] sm:$0xf]
  %v30 = vld [vmem:[%s0 + $0x4] sm:$0xf]
  %v31 = vld [vmem:[%s0 + $0x8] sm:$0xf]
  %v32 = vld [vmem:[%s0 + $0xc] sm:$0xf]
  %v33 = vld [vmem:[%s0 + $0x10] sm:$0xf]
  %v34 = vld [vmem:[%s0 + $0x14] sm:$0xf]
  %v35 = vld [vmem:[%s0 + $0x18] sm:$0xf]
  %v36 = vld [vmem:[%s0 + $0x1c] sm:$0xf]
  %v37 = vld [vmem:[%s1] sm:$0xf]
  %v38 = vld [vmem:[%s1 + $0x4] sm:$0xf]
  %v39 = vld [vmem:[%s1 + $0x8] sm:$0x3]
  %v40 = vld [vmem:[%s3] sm:$0x1]
  %v42 = vlaneseq
  %v43 = vshrl.u32 %v42, 7
  %v44 = vsub.s32 0, %v43
  %v45 = vrot.slane %v40, %v44
  %v55 = vunpack.c.l.b16 %v29
  %v56 = vunpack.c.l.b16 %v30
  %v57 = vunpack.c.l.b16 %v31
  %v58 = vunpack.c.l.b16 %v32
  %v59 = vunpack.c.l.b16 %v33
  %v60 = vunpack.c.l.b16 %v34
  %v61 = vunpack.c.l.b16 %v35
  %v62 = vunpack.c.l.b16 %v36
  %v63 = vpack.c.b16 %v56, %v55
  %v64 = vpack.c.b16 %v58, %v57
  %v65 = vpack.c.b16 %v60, %v59
  %v66 = vpack.c.b16 %v62, %v61
  %v70 = vunpack.c.l.b16 %v37
  %v71 = vunpack.c.l.b16 %v38
  %v72 = vunpack.c.l.b16 %v39
  %v73 = vpack.c.b16 %v71, %v70
  %v74 = vpack.c.b16 %v72, %v72
  %vm76 = vcmask 162816
  %v78 = vsel %vm76, %v63, 0
  %v81 = vsel %vm76, %v64, 0
  %v84 = vsel %vm76, %v65, 0
  %v87 = vsel %vm76, %v66, 0
  %vm89 = vcmask 1041408
  %v91 = vsel %vm89, %v74, 0
  %93 = vmatprep.subr.bf16.mxu0 0
  %94 = vmatpush1.bf16.msra.mxu0 %v73
  %95 = vmatprep.subr.bf16.mxu0 0
  %96 = vmatpush1.bf16.msra.mxu0 %v91
  %97 = vmatprep.subr.bf16.mxu0 0
  %98 = vmatpush1.bf16.msra.mxu0 0
  %99 = vmatprep.subr.bf16.mxu0 0
  %100 = vmatpush1.bf16.msra.mxu0 0
  %101 = vmatprep.subr.bf16.mxu0 0
  %102 = vmatpush1.bf16.msra.mxu0 0
  %103 = vmatprep.subr.bf16.mxu0 0
  %104 = vmatpush1.bf16.msra.mxu0 0
  %105 = vmatprep.subr.bf16.mxu0 0
  %106 = vmatpush1.bf16.msra.mxu0 0
  %107 = vmatprep.subr.bf16.mxu0 0
  %108 = vmatpush1.bf16.msra.mxu0 0
  %109 = vmatprep.subr.bf16.mxu0 0
  %110 = vmatpush1.bf16.msra.mxu0 0
  %111 = vmatprep.subr.bf16.mxu0 0
  %112 = vmatpush1.bf16.msra.mxu0 0
  %113 = vmatprep.subr.bf16.mxu0 0
  %114 = vmatpush1.bf16.msra.mxu0 0
  %115 = vmatprep.subr.bf16.mxu0 0
  %116 = vmatpush1.bf16.msra.mxu0 0
  %117 = vmatprep.subr.bf16.mxu0 0
  %118 = vmatpush1.bf16.msra.mxu0 0
  %119 = vmatprep.subr.bf16.mxu0 0
  %120 = vmatpush1.bf16.msra.mxu0 0
  %121 = vmatprep.subr.bf16.mxu0 0
  %122 = vmatpush1.bf16.msra.mxu0 0
  %123 = vmatprep.subr.bf16.mxu0 0
  %124 = vmatpush1.bf16.msra.mxu0 0
  %125 = vmatprep.mubr.bf16.mxu0 0
  %126 = vmatmul.mubr.bf16.gmra.mrb[0].mxu0 %v78
  %v127 = vpop.f32.mrb[0].mxu0
  %v128 = vadd.f32 %v45, %v127
  %v129 = vpop.f32.mrb[0].mxu0
  %v130 = vpop.f32.mrb[0].mxu0
  %v131 = vadd.f32 %v45, %v130
  %v132 = vpop.f32.mrb[0].mxu0
  %133 = vmatprep.mubr.bf16.mxu0 0
  %134 = vmatmul.mubr.bf16.gmra.mrb[0].mxu0 %v81
  %v135 = vpop.f32.mrb[0].mxu0
  %v136 = vadd.f32 %v45, %v135
  %v137 = vpop.f32.mrb[0].mxu0
  %v138 = vpop.f32.mrb[0].mxu0
  %v139 = vadd.f32 %v45, %v138
  %v140 = vpop.f32.mrb[0].mxu0
  %141 = vmatprep.mubr.bf16.mxu0 0
  %142 = vmatmul.mubr.bf16.gmra.mrb[0].mxu0 %v84
  %v143 = vpop.f32.mrb[0].mxu0
  %v144 = vadd.f32 %v45, %v143
  %v145 = vpop.f32.mrb[0].mxu0
  %v146 = vpop.f32.mrb[0].mxu0
  %v147 = vadd.f32 %v45, %v146
  %v148 = vpop.f32.mrb[0].mxu0
  %149 = vmatprep.mubr.bf16.mxu0 0
  %150 = vmatmul.mubr.bf16.gmra.mrb[0].mxu0 %v87
  %v151 = vpop.f32.mrb[0].mxu0
  %v152 = vadd.f32 %v45, %v151
  %v153 = vpop.f32.mrb[0].mxu0
  %v154 = vpop.f32.mrb[0].mxu0
  %v155 = vadd.f32 %v45, %v154
  %v156 = vpop.f32.mrb[0].mxu0
  %157 = vdwg.mxu0
  %158 = vst [vmem:[#allocation3] sm:$0xff] %v128
  %159 = vst [vmem:[#allocation3 + $0x8] sm:$0xff] %v131
  %160 = vst [vmem:[#allocation3 + $0x10] sm:$0xff] %v136
  %161 = vst [vmem:[#allocation3 + $0x18] sm:$0xff] %v139
  %162 = vst [vmem:[#allocation3 + $0x20] sm:$0xff] %v144
  %163 = vst [vmem:[#allocation3 + $0x28] sm:$0xff] %v147
  %164 = vst [vmem:[#allocation3 + $0x30] sm:$0xff] %v152
  %165 = vst [vmem:[#allocation3 + $0x38] sm:$0xff] %v155
  %v166 = vld [vmem:[%s2] sm:$0xf]
  %v167 = vld [vmem:[%s2 + $0x4] sm:$0xf]
  %v168 = vld [vmem:[%s2 + $0x8] sm:$0xf]
  %v169 = vld [vmem:[%s2 + $0xc] sm:$0xf]
  %v170 = vld [vmem:[%s2 + $0x10] sm:$0xf]
  %v171 = vld [vmem:[%s2 + $0x14] sm:$0xf]
  %v172 = vld [vmem:[%s2 + $0x18] sm:$0xf]
  %v173 = vld [vmem:[%s2 + $0x1c] sm:$0xf]
  %v174 = vld [vmem:[%s2 + $0x20] sm:$0xf]
  %v175 = vld [vmem:[%s2 + $0x24] sm:$0xf]
  %v176 = vld [vmem:[%s2 + $0x28] sm:$0xf]
  %v177 = vld [vmem:[%s2 + $0x2c] sm:$0xf]
  %v178 = vld [vmem:[%s2 + $0x30] sm:$0xf]
  %v179 = vld [vmem:[%s2 + $0x34] sm:$0xf]
  %v180 = vld [vmem:[%s2 + $0x38] sm:$0xf]
  %v181 = vld [vmem:[%s2 + $0x3c] sm:$0xf]
  %v182 = vld [vmem:[#allocation2] sm:$0xff]
  %v183 = vld [vmem:[#allocation3] sm:$0xff]
  %v184 = vpack.c.bf16 %v182, %v182
  %v201 = vunpack.c.l.b16 %v166
  %v202 = vunpack.c.l.b16 %v167
  %v203 = vunpack.c.l.b16 %v168
  %v204 = vunpack.c.l.b16 %v169
  %v205 = vunpack.c.l.b16 %v170
  %v206 = vunpack.c.l.b16 %v171
  %v207 = vunpack.c.l.b16 %v172
  %v208 = vunpack.c.l.b16 %v173
  %v209 = vunpack.c.l.b16 %v174
  %v210 = vunpack.c.l.b16 %v175
  %v211 = vunpack.c.l.b16 %v176
  %v212 = vunpack.c.l.b16 %v177
  %v213 = vunpack.c.l.b16 %v178
  %v214 = vunpack.c.l.b16 %v179
  %v215 = vunpack.c.l.b16 %v180
  %v216 = vunpack.c.l.b16 %v181
  %v217 = vpack.c.b16 %v202, %v201
  %v218 = vpack.c.b16 %v204, %v203
  %v219 = vpack.c.b16 %v206, %v205
  %v220 = vpack.c.b16 %v208, %v207
  %v221 = vpack.c.b16 %v210, %v209
  %v222 = vpack.c.b16 %v212, %v211
  %v223 = vpack.c.b16 %v214, %v213
  %v224 = vpack.c.b16 %v216, %v215
  %233 = vmatprep.subr.bf16.mxu0 0
  %234 = vmatpush1.bf16.msra.mxu0 %v217
  %235 = vmatprep.subr.bf16.mxu0 0
  %236 = vmatpush1.bf16.msra.mxu0 %v218
  %237 = vmatprep.subr.bf16.mxu0 0
  %238 = vmatpush1.bf16.msra.mxu0 %v219
  %239 = vmatprep.subr.bf16.mxu0 0
  %240 = vmatpush1.bf16.msra.mxu0 %v220
  %241 = vmatprep.subr.bf16.mxu0 0
  %242 = vmatpush1.bf16.msra.mxu0 %v221
  %243 = vmatprep.subr.bf16.mxu0 0
  %244 = vmatpush1.bf16.msra.mxu0 %v222
  %245 = vmatprep.subr.bf16.mxu0 0
  %246 = vmatpush1.bf16.msra.mxu0 %v223
  %247 = vmatprep.subr.bf16.mxu0 0
  %248 = vmatpush1.bf16.msra.mxu0 %v224
  %249 = vmatprep.subr.bf16.mxu0 0
  %250 = vmatpush1.bf16.msra.mxu0 0
  %251 = vmatprep.subr.bf16.mxu0 0
  %252 = vmatpush1.bf16.msra.mxu0 0
  %253 = vmatprep.subr.bf16.mxu0 0
  %254 = vmatpush1.bf16.msra.mxu0 0
  %255 = vmatprep.subr.bf16.mxu0 0
  %256 = vmatpush1.bf16.msra.mxu0 0
  %257 = vmatprep.subr.bf16.mxu0 0
  %258 = vmatpush1.bf16.msra.mxu0 0
  %259 = vmatprep.subr.bf16.mxu0 0
  %260 = vmatpush1.bf16.msra.mxu0 0
  %261 = vmatprep.subr.bf16.mxu0 0
  %262 = vmatpush1.bf16.msra.mxu0 0
  %263 = vmatprep.subr.bf16.mxu0 0
  %264 = vmatpush1.bf16.msra.mxu0 0
  %265 = vmatprep.mubr.bf16.mxu0 0
  %266 = vmatmul.mubr.bf16.gmra.mrb[0].mxu0 %v184
  %v267 = vpop.f32.mrb[0].mxu0
  %v268 = vadd.f32 0.0, %v267
  %v269 = vpop.f32.mrb[0].mxu0
  %v270 = vpop.f32.mrb[0].mxu0
  %v271 = vpop.f32.mrb[0].mxu0
  %272 = vdwg.mxu0
  %v273 = vadd.f32 %v183, %v268
  %v274 = vtanh.pop %v273
  %s275 = scalar_lea.vmem [#allocation3], 8
  %v276 = vld [vmem:[%s275] sm:$0xff]
  %v277 = vpack.c.bf16 %v274, %v274
  %278 = vmatprep.subr.bf16.mxu0 0
  %279 = vmatpush1.bf16.msra.mxu0 %v217
  %280 = vmatprep.subr.bf16.mxu0 0
  %281 = vmatpush1.bf16.msra.mxu0 %v218
  %282 = vmatprep.subr.bf16.mxu0 0
  %283 = vmatpush1.bf16.msra.mxu0 %v219
  %284 = vmatprep.subr.bf16.mxu0 0
  %285 = vmatpush1.bf16.msra.mxu0 %v220
  %286 = vmatprep.subr.bf16.mxu0 0
  %287 = vmatpush1.bf16.msra.mxu0 %v221
  %288 = vmatprep.subr.bf16.mxu0 0
  %289 = vmatpush1.bf16.msra.mxu0 %v222
  %290 = vmatprep.subr.bf16.mxu0 0
  %291 = vmatpush1.bf16.msra.mxu0 %v223
  %292 = vmatprep.subr.bf16.mxu0 0
  %293 = vmatpush1.bf16.msra.mxu0 %v224
  %294 = vmatprep.subr.bf16.mxu0 0
  %295 = vmatpush1.bf16.msra.mxu0 0
  %296 = vmatprep.subr.bf16.mxu0 0
  %297 = vmatpush1.bf16.msra.mxu0 0
  %298 = vmatprep.subr.bf16.mxu0 0
  %299 = vmatpush1.bf16.msra.mxu0 0
  %300 = vmatprep.subr.bf16.mxu0 0
  %301 = vmatpush1.bf16.msra.mxu0 0
  %302 = vmatprep.subr.bf16.mxu0 0
  %303 = vmatpush1.bf16.msra.mxu0 0
  %304 = vmatprep.subr.bf16.mxu0 0
  %305 = vmatpush1.bf16.msra.mxu0 0
  %306 = vmatprep.subr.bf16.mxu0 0
  %307 = vmatpush1.bf16.msra.mxu0 0
  %308 = vmatprep.subr.bf16.mxu0 0
  %309 = vmatpush1.bf16.msra.mxu0 0
  %310 = vmatprep.mubr.bf16.mxu0 0
  %311 = vmatmul.mubr.bf16.gmra.mrb[0].mxu0 %v277
  %v312 = vpop.f32.mrb[0].mxu0
  %v313 = vadd.f32 0.0, %v312
  %v314 = vpop.f32.mrb[0].mxu0
  %v315 = vpop.f32.mrb[0].mxu0
  %v316 = vpop.f32.mrb[0].mxu0
  %317 = vdwg.mxu0
  %v318 = vadd.f32 %v276, %v313
  %v319 = vtanh.pop %v318
  %s320 = scalar_lea.vmem [#allocation3], 16
  %v321 = vld [vmem:[%s320] sm:$0xff]
  %v322 = vpack.c.bf16 %v319, %v319
  %323 = vmatprep.subr.bf16.mxu0 0
  %324 = vmatpush1.bf16.msra.mxu0 %v217
  %325 = vmatprep.subr.bf16.mxu0 0
  %326 = vmatpush1.bf16.msra.mxu0 %v218
  %327 = vmatprep.subr.bf16.mxu0 0
  %328 = vmatpush1.bf16.msra.mxu0 %v219
  %329 = vmatprep.subr.bf16.mxu0 0
  %330 = vmatpush1.bf16.msra.mxu0 %v220
  %331 = vmatprep.subr.bf16.mxu0 0
  %332 = vmatpush1.bf16.msra.mxu0 %v221
  %333 = vmatprep.subr.bf16.mxu0 0
  %334 = vmatpush1.bf16.msra.mxu0 %v222
  %335 = vmatprep.subr.bf16.mxu0 0
  %336 = vmatpush1.bf16.msra.mxu0 %v223
  %337 = vmatprep.subr.bf16.mxu0 0
  %338 = vmatpush1.bf16.msra.mxu0 %v224
  %339 = vmatprep.subr.bf16.mxu0 0
  %340 = vmatpush1.bf16.msra.mxu0 0
  %341 = vmatprep.subr.bf16.mxu0 0
  %342 = vmatpush1.bf16.msra.mxu0 0
  %343 = vmatprep.subr.bf16.mxu0 0
  %344 = vmatpush1.bf16.msra.mxu0 0
  %345 = vmatprep.subr.bf16.mxu0 0
  %346 = vmatpush1.bf16.msra.mxu0 0
  %347 = vmatprep.subr.bf16.mxu0 0
  %348 = vmatpush1.bf16.msra.mxu0 0
  %349 = vmatprep.subr.bf16.mxu0 0
  %350 = vmatpush1.bf16.msra.mxu0 0
  %351 = vmatprep.subr.bf16.mxu0 0
  %352 = vmatpush1.bf16.msra.mxu0 0
  %353 = vmatprep.subr.bf16.mxu0 0
  %354 = vmatpush1.bf16.msra.mxu0 0
  %355 = vmatprep.mubr.bf16.mxu0 0
  %356 = vmatmul.mubr.bf16.gmra.mrb[0].mxu0 %v322
  %v357 = vpop.f32.mrb[0].mxu0
  %v358 = vadd.f32 0.0, %v357
  %v359 = vpop.f32.mrb[0].mxu0
  %v360 = vpop.f32.mrb[0].mxu0
  %v361 = vpop.f32.mrb[0].mxu0
  %362 = vdwg.mxu0
  %v363 = vadd.f32 %v321, %v358
  %v364 = vtanh.pop %v363
  %s365 = scalar_lea.vmem [#allocation3], 24
  %v366 = vld [vmem:[%s365] sm:$0xff]
  %v367 = vpack.c.bf16 %v364, %v364
  %368 = vmatprep.subr.bf16.mxu0 0
  %369 = vmatpush1.bf16.msra.mxu0 %v217
  %370 = vmatprep.subr.bf16.mxu0 0
  %371 = vmatpush1.bf16.msra.mxu0 %v218
  %372 = vmatprep.subr.bf16.mxu0 0
  %373 = vmatpush1.bf16.msra.mxu0 %v219
  %374 = vmatprep.subr.bf16.mxu0 0
  %375 = vmatpush1.bf16.msra.mxu0 %v220
  %376 = vmatprep.subr.bf16.mxu0 0
  %377 = vmatpush1.bf16.msra.mxu0 %v221
  %378 = vmatprep.subr.bf16.mxu0 0
  %379 = vmatpush1.bf16.msra.mxu0 %v222
  %380 = vmatprep.subr.bf16.mxu0 0
  %381 = vmatpush1.bf16.msra.mxu0 %v223
  %382 = vmatprep.subr.bf16.mxu0 0
  %383 = vmatpush1.bf16.msra.mxu0 %v224
  %384 = vmatprep.subr.bf16.mxu0 0
  %385 = vmatpush1.bf16.msra.mxu0 0
  %386 = vmatprep.subr.bf16.mxu0 0
  %387 = vmatpush1.bf16.msra.mxu0 0
  %388 = vmatprep.subr.bf16.mxu0 0
  %389 = vmatpush1.bf16.msra.mxu0 0
  %390 = vmatprep.subr.bf16.mxu0 0
  %391 = vmatpush1.bf16.msra.mxu0 0
  %392 = vmatprep.subr.bf16.mxu0 0
  %393 = vmatpush1.bf16.msra.mxu0 0
  %394 = vmatprep.subr.bf16.mxu0 0
  %395 = vmatpush1.bf16.msra.mxu0 0
  %396 = vmatprep.subr.bf16.mxu0 0
  %397 = vmatpush1.bf16.msra.mxu0 0
  %398 = vmatprep.subr.bf16.mxu0 0
  %399 = vmatpush1.bf16.msra.mxu0 0
  %400 = vmatprep.mubr.bf16.mxu0 0
  %401 = vmatmul.mubr.bf16.gmra.mrb[0].mxu0 %v367
  %v402 = vpop.f32.mrb[0].mxu0
  %v403 = vadd.f32 0.0, %v402
  %v404 = vpop.f32.mrb[0].mxu0
  %v405 = vpop.f32.mrb[0].mxu0
  %v406 = vpop.f32.mrb[0].mxu0
  %407 = vdwg.mxu0
  %v408 = vadd.f32 %v366, %v403
  %v409 = vtanh.pop %v408
  %s410 = scalar_lea.vmem [#allocation3], 32
  %v411 = vld [vmem:[%s410] sm:$0xff]
  %v412 = vpack.c.bf16 %v409, %v409
  %413 = vmatprep.subr.bf16.mxu0 0
  %414 = vmatpush1.bf16.msra.mxu0 %v217
  %415 = vmatprep.subr.bf16.mxu0 0
  %416 = vmatpush1.bf16.msra.mxu0 %v218
  %417 = vmatprep.subr.bf16.mxu0 0
  %418 = vmatpush1.bf16.msra.mxu0 %v219
  %419 = vmatprep.subr.bf16.mxu0 0
  %420 = vmatpush1.bf16.msra.mxu0 %v220
  %421 = vmatprep.subr.bf16.mxu0 0
  %422 = vmatpush1.bf16.msra.mxu0 %v221
  %423 = vmatprep.subr.bf16.mxu0 0
  %424 = vmatpush1.bf16.msra.mxu0 %v222
  %425 = vmatprep.subr.bf16.mxu0 0
  %426 = vmatpush1.bf16.msra.mxu0 %v223
  %427 = vmatprep.subr.bf16.mxu0 0
  %428 = vmatpush1.bf16.msra.mxu0 %v224
  %429 = vmatprep.subr.bf16.mxu0 0
  %430 = vmatpush1.bf16.msra.mxu0 0
  %431 = vmatprep.subr.bf16.mxu0 0
  %432 = vmatpush1.bf16.msra.mxu0 0
  %433 = vmatprep.subr.bf16.mxu0 0
  %434 = vmatpush1.bf16.msra.mxu0 0
  %435 = vmatprep.subr.bf16.mxu0 0
  %436 = vmatpush1.bf16.msra.mxu0 0
  %437 = vmatprep.subr.bf16.mxu0 0
  %438 = vmatpush1.bf16.msra.mxu0 0
  %439 = vmatprep.subr.bf16.mxu0 0
  %440 = vmatpush1.bf16.msra.mxu0 0
  %441 = vmatprep.subr.bf16.mxu0 0
  %442 = vmatpush1.bf16.msra.mxu0 0
  %443 = vmatprep.subr.bf16.mxu0 0
  %444 = vmatpush1.bf16.msra.mxu0 0
  %445 = vmatprep.mubr.bf16.mxu0 0
  %446 = vmatmul.mubr.bf16.gmra.mrb[0].mxu0 %v412
  %v447 = vpop.f32.mrb[0].mxu0
  %v448 = vadd.f32 0.0, %v447
  %v449 = vpop.f32.mrb[0].mxu0
  %v450 = vpop.f32.mrb[0].mxu0
  %v451 = vpop.f32.mrb[0].mxu0
  %452 = vdwg.mxu0
  %v453 = vadd.f32 %v411, %v448
  %v454 = vtanh.pop %v453
  %s455 = scalar_lea.vmem [#allocation3], 40
  %v456 = vld [vmem:[%s455] sm:$0xff]
  %v457 = vpack.c.bf16 %v454, %v454
  %458 = vmatprep.subr.bf16.mxu0 0
  %459 = vmatpush1.bf16.msra.mxu0 %v217
  %460 = vmatprep.subr.bf16.mxu0 0
  %461 = vmatpush1.bf16.msra.mxu0 %v218
  %462 = vmatprep.subr.bf16.mxu0 0
  %463 = vmatpush1.bf16.msra.mxu0 %v219
  %464 = vmatprep.subr.bf16.mxu0 0
  %465 = vmatpush1.bf16.msra.mxu0 %v220
  %466 = vmatprep.subr.bf16.mxu0 0
  %467 = vmatpush1.bf16.msra.mxu0 %v221
  %468 = vmatprep.subr.bf16.mxu0 0
  %469 = vmatpush1.bf16.msra.mxu0 %v222
  %470 = vmatprep.subr.bf16.mxu0 0
  %471 = vmatpush1.bf16.msra.mxu0 %v223
  %472 = vmatprep.subr.bf16.mxu0 0
  %473 = vmatpush1.bf16.msra.mxu0 %v224
  %474 = vmatprep.subr.bf16.mxu0 0
  %475 = vmatpush1.bf16.msra.mxu0 0
  %476 = vmatprep.subr.bf16.mxu0 0
  %477 = vmatpush1.bf16.msra.mxu0 0
  %478 = vmatprep.subr.bf16.mxu0 0
  %479 = vmatpush1.bf16.msra.mxu0 0
  %480 = vmatprep.subr.bf16.mxu0 0
  %481 = vmatpush1.bf16.msra.mxu0 0
  %482 = vmatprep.subr.bf16.mxu0 0
  %483 = vmatpush1.bf16.msra.mxu0 0
  %484 = vmatprep.subr.bf16.mxu0 0
  %485 = vmatpush1.bf16.msra.mxu0 0
  %486 = vmatprep.subr.bf16.mxu0 0
  %487 = vmatpush1.bf16.msra.mxu0 0
  %488 = vmatprep.subr.bf16.mxu0 0
  %489 = vmatpush1.bf16.msra.mxu0 0
  %490 = vmatprep.mubr.bf16.mxu0 0
  %491 = vmatmul.mubr.bf16.gmra.mrb[0].mxu0 %v457
  %v492 = vpop.f32.mrb[0].mxu0
  %v493 = vadd.f32 0.0, %v492
  %v494 = vpop.f32.mrb[0].mxu0
  %v495 = vpop.f32.mrb[0].mxu0
  %v496 = vpop.f32.mrb[0].mxu0
  %497 = vdwg.mxu0
  %v498 = vadd.f32 %v456, %v493
  %v499 = vtanh.pop %v498
  %s500 = scalar_lea.vmem [#allocation3], 48
  %v501 = vld [vmem:[%s500] sm:$0xff]
  %v502 = vpack.c.bf16 %v499, %v499
  %503 = vmatprep.subr.bf16.mxu0 0
  %504 = vmatpush1.bf16.msra.mxu0 %v217
  %505 = vmatprep.subr.bf16.mxu0 0
  %506 = vmatpush1.bf16.msra.mxu0 %v218
  %507 = vmatprep.subr.bf16.mxu0 0
  %508 = vmatpush1.bf16.msra.mxu0 %v219
  %509 = vmatprep.subr.bf16.mxu0 0
  %510 = vmatpush1.bf16.msra.mxu0 %v220
  %511 = vmatprep.subr.bf16.mxu0 0
  %512 = vmatpush1.bf16.msra.mxu0 %v221
  %513 = vmatprep.subr.bf16.mxu0 0
  %514 = vmatpush1.bf16.msra.mxu0 %v222
  %515 = vmatprep.subr.bf16.mxu0 0
  %516 = vmatpush1.bf16.msra.mxu0 %v223
  %517 = vmatprep.subr.bf16.mxu0 0
  %518 = vmatpush1.bf16.msra.mxu0 %v224
  %519 = vmatprep.subr.bf16.mxu0 0
  %520 = vmatpush1.bf16.msra.mxu0 0
  %521 = vmatprep.subr.bf16.mxu0 0
  %522 = vmatpush1.bf16.msra.mxu0 0
  %523 = vmatprep.subr.bf16.mxu0 0
  %524 = vmatpush1.bf16.msra.mxu0 0
  %525 = vmatprep.subr.bf16.mxu0 0
  %526 = vmatpush1.bf16.msra.mxu0 0
  %527 = vmatprep.subr.bf16.mxu0 0
  %528 = vmatpush1.bf16.msra.mxu0 0
  %529 = vmatprep.subr.bf16.mxu0 0
  %530 = vmatpush1.bf16.msra.mxu0 0
  %531 = vmatprep.subr.bf16.mxu0 0
  %532 = vmatpush1.bf16.msra.mxu0 0
  %533 = vmatprep.subr.bf16.mxu0 0
  %534 = vmatpush1.bf16.msra.mxu0 0
  %535 = vmatprep.mubr.bf16.mxu0 0
  %536 = vmatmul.mubr.bf16.gmra.mrb[0].mxu0 %v502
  %v537 = vpop.f32.mrb[0].mxu0
  %v538 = vadd.f32 0.0, %v537
  %v539 = vpop.f32.mrb[0].mxu0
  %v540 = vpop.f32.mrb[0].mxu0
  %v541 = vpop.f32.mrb[0].mxu0
  %542 = vdwg.mxu0
  %v543 = vadd.f32 %v501, %v538
  %v544 = vtanh.pop %v543
  %s545 = scalar_lea.vmem [#allocation3], 56
  %v546 = vld [vmem:[%s545] sm:$0xff]
  %v547 = vpack.c.bf16 %v544, %v544
  %548 = vmatprep.subr.bf16.mxu0 0
  %549 = vmatpush1.bf16.msra.mxu0 %v217
  %550 = vmatprep.subr.bf16.mxu0 0
  %551 = vmatpush1.bf16.msra.mxu0 %v218
  %552 = vmatprep.subr.bf16.mxu0 0
  %553 = vmatpush1.bf16.msra.mxu0 %v219
  %554 = vmatprep.subr.bf16.mxu0 0
  %555 = vmatpush1.bf16.msra.mxu0 %v220
  %556 = vmatprep.subr.bf16.mxu0 0
  %557 = vmatpush1.bf16.msra.mxu0 %v221
  %558 = vmatprep.subr.bf16.mxu0 0
  %559 = vmatpush1.bf16.msra.mxu0 %v222
  %560 = vmatprep.subr.bf16.mxu0 0
  %561 = vmatpush1.bf16.msra.mxu0 %v223
  %562 = vmatprep.subr.bf16.mxu0 0
  %563 = vmatpush1.bf16.msra.mxu0 %v224
  %564 = vmatprep.subr.bf16.mxu0 0
  %565 = vmatpush1.bf16.msra.mxu0 0
  %566 = vmatprep.subr.bf16.mxu0 0
  %567 = vmatpush1.bf16.msra.mxu0 0
  %568 = vmatprep.subr.bf16.mxu0 0
  %569 = vmatpush1.bf16.msra.mxu0 0
  %570 = vmatprep.subr.bf16.mxu0 0
  %571 = vmatpush1.bf16.msra.mxu0 0
  %572 = vmatprep.subr.bf16.mxu0 0
  %573 = vmatpush1.bf16.msra.mxu0 0
  %574 = vmatprep.subr.bf16.mxu0 0
  %575 = vmatpush1.bf16.msra.mxu0 0
  %576 = vmatprep.subr.bf16.mxu0 0
  %577 = vmatpush1.bf16.msra.mxu0 0
  %578 = vmatprep.subr.bf16.mxu0 0
  %579 = vmatpush1.bf16.msra.mxu0 0
  %580 = vmatprep.mubr.bf16.mxu0 0
  %581 = vmatmul.mubr.bf16.gmra.mrb[0].mxu0 %v547
  %v582 = vpop.f32.mrb[0].mxu0
  %v583 = vadd.f32 0.0, %v582
  %v584 = vpop.f32.mrb[0].mxu0
  %v585 = vpop.f32.mrb[0].mxu0
  %v586 = vpop.f32.mrb[0].mxu0
  %587 = vdwg.mxu0
  %v588 = vadd.f32 %v546, %v583
  %v589 = vtanh.pop %v588
  %590 = vst [vmem:[#allocation2] sm:$0xff] %v589
  // Predicated region
  $region30: #{rnn_model_forward.1} parent=0 // pred_check
    %p591 = pneg %p24
  $region31: #{rnn_model_forward.1} parent=0 // pred_check_branch
    %593 = sbr.rel (%p591) target = $region33
  $region32: #{rnn_model_forward.1} parent=0 // pred_region
    %v594 = vld [vmem:[#allocation2] sm:$0xff]
    %v595 = vtanh.pop %v594
    %v596 = vpack.c.bf16 %v595, %v595
    %v597 = vld [vmem:[%s4] sm:$0xf]
    %v598 = vld [vmem:[%s4 + $0x4] sm:$0xf]
    %v599 = vld [vmem:[%s4 + $0x8] sm:$0xf]
    %v600 = vld [vmem:[%s4 + $0xc] sm:$0xf]
    %v601 = vld [vmem:[%s4 + $0x10] sm:$0xf]
    %v602 = vld [vmem:[%s4 + $0x14] sm:$0xf]
    %v603 = vld [vmem:[%s4 + $0x18] sm:$0xf]
    %v604 = vld [vmem:[%s4 + $0x1c] sm:$0xf]
    %v605 = vld [vmem:[%s4 + $0x20] sm:$0xf]
    %v606 = vld [vmem:[%s4 + $0x24] sm:$0xf]
    %v607 = vld [vmem:[%s4 + $0x28] sm:$0xf]
    %v608 = vld [vmem:[%s4 + $0x2c] sm:$0xf]
    %v609 = vld [vmem:[%s4 + $0x30] sm:$0xf]
    %v610 = vld [vmem:[%s4 + $0x34] sm:$0xf]
    %v611 = vld [vmem:[%s4 + $0x38] sm:$0xf]
    %v612 = vld [vmem:[%s4 + $0x3c] sm:$0xf]
    %v613 = vld [vmem:[%s5] sm:$0x1]
    %v615 = vlaneseq
    %v616 = vshrl.u32 %v615, 7
    %v617 = vsub.s32 0, %v616
    %v618 = vrot.slane %v613, %v617
    %v636 = vunpack.c.l.b16 %v597
    %v637 = vunpack.c.l.b16 %v598
    %v638 = vunpack.c.l.b16 %v599
    %v639 = vunpack.c.l.b16 %v600
    %v640 = vunpack.c.l.b16 %v601
    %v641 = vunpack.c.l.b16 %v602
    %v642 = vunpack.c.l.b16 %v603
    %v643 = vunpack.c.l.b16 %v604
    %v644 = vunpack.c.l.b16 %v605
    %v645 = vunpack.c.l.b16 %v606
    %v646 = vunpack.c.l.b16 %v607
    %v647 = vunpack.c.l.b16 %v608
    %v648 = vunpack.c.l.b16 %v609
    %v649 = vunpack.c.l.b16 %v610
    %v650 = vunpack.c.l.b16 %v611
    %v651 = vunpack.c.l.b16 %v612
    %v652 = vpack.c.b16 %v637, %v636
    %v653 = vpack.c.b16 %v639, %v638
    %v654 = vpack.c.b16 %v641, %v640
    %v655 = vpack.c.b16 %v643, %v642
    %v656 = vpack.c.b16 %v645, %v644
    %v657 = vpack.c.b16 %v647, %v646
    %v658 = vpack.c.b16 %v649, %v648
    %v659 = vpack.c.b16 %v651, %v650
    %668 = vmatprep.subr.bf16.mxu0 0
    %669 = vmatpush1.bf16.msra.mxu0 %v652
    %670 = vmatprep.subr.bf16.mxu0 0
    %671 = vmatpush1.bf16.msra.mxu0 %v653
    %672 = vmatprep.subr.bf16.mxu0 0
    %673 = vmatpush1.bf16.msra.mxu0 %v654
    %674 = vmatprep.subr.bf16.mxu0 0
    %675 = vmatpush1.bf16.msra.mxu0 %v655
    %676 = vmatprep.subr.bf16.mxu0 0
    %677 = vmatpush1.bf16.msra.mxu0 %v656
    %678 = vmatprep.subr.bf16.mxu0 0
    %679 = vmatpush1.bf16.msra.mxu0 %v657
    %680 = vmatprep.subr.bf16.mxu0 0
    %681 = vmatpush1.bf16.msra.mxu0 %v658
    %682 = vmatprep.subr.bf16.mxu0 0
    %683 = vmatpush1.bf16.msra.mxu0 %v659
    %684 = vmatprep.subr.bf16.mxu0 0
    %685 = vmatpush1.bf16.msra.mxu0 0
    %686 = vmatprep.subr.bf16.mxu0 0
    %687 = vmatpush1.bf16.msra.mxu0 0
    %688 = vmatprep.subr.bf16.mxu0 0
    %689 = vmatpush1.bf16.msra.mxu0 0
    %690 = vmatprep.subr.bf16.mxu0 0
    %691 = vmatpush1.bf16.msra.mxu0 0
    %692 = vmatprep.subr.bf16.mxu0 0
    %693 = vmatpush1.bf16.msra.mxu0 0
    %694 = vmatprep.subr.bf16.mxu0 0
    %695 = vmatpush1.bf16.msra.mxu0 0
    %696 = vmatprep.subr.bf16.mxu0 0
    %697 = vmatpush1.bf16.msra.mxu0 0
    %698 = vmatprep.subr.bf16.mxu0 0
    %699 = vmatpush1.bf16.msra.mxu0 0
    %700 = vmatprep.mubr.bf16.mxu0 0
    %701 = vmatmul.mubr.bf16.gmra.mrb[0].mxu0 %v596
    %v702 = vpop.f32.mrb[0].mxu0
    %v703 = vadd.f32 %v618, %v702
    %v704 = vpop.f32.mrb[0].mxu0
    %v705 = vpop.f32.mrb[0].mxu0
    %v706 = vpop.f32.mrb[0].mxu0
    %707 = vdwg.mxu0
    %708 = vst [vmem:[%s6] sm:$0xff] %v703
  $region33: #{rnn_model_forward.1} parent=0 // pred_fallthru
    _
  // Predicated region
  $region34: #{rnn_model_forward.1} parent=0 // pred_check
    _
  $region35: #{rnn_model_forward.1} parent=0 // pred_check_branch
    %710 = sbr.rel (0) target = $region37
  $region36: #{rnn_model_forward.1} parent=0 // pred_region
    _
  $region37: #{rnn_model_forward.1} parent=0 // pred_fallthru
    _
  // Predicated region
  $region38: #{rnn_model_forward.1} parent=0 // pred_check
    _
  $region39: #{rnn_model_forward.1} parent=0 // pred_check_branch
    %712 = sbr.rel (0) target = $region41
  $region40: #{rnn_model_forward.1} parent=0 // pred_region
    _
  $region41: #{rnn_model_forward.1} parent=0 // pred_fallthru
    _

</llo_original>
